<compile_context>
chip_gen: v7x
topology: tpu7x:2x2x1
jax: 0.10.0
libtpu: 0.0.40
codegen_flags: <defaults>
</compile_context>

<pallas_src>
import jax
import jax.numpy as jnp
from jax import lax
from jax.experimental import pallas as pl
from jax.experimental.pallas import tpu as pltpu


def _round_up(x, m):
    return (x + m - 1) // m * m


def _cdiv(a, b):
    return (a + b - 1) // b


def _default_vmem_limit_bytes():
    # Generation-aware cap: ~100 MiB on 128-MiB chips (v5e/v6e), ~56 MiB on
    # 64-MiB v7x.  Falls back to a conservative 56 MiB if the query fails.
    try:
        phys = pltpu.get_tpu_info().vmem_capacity_bytes
    except Exception:
        phys = 64 * 1024 * 1024
    return int(min((phys * 7) // 8, 100 * 1024 * 1024))


def _pick_block_t(B, T, S, D, *, mm_itemsize, out_itemsize, vmem_budget):
    """Largest tgt tile (multiple of 8, <=256) that fits the VMEM budget."""
    S_lane = _round_up(S, 128)
    D_lane = _round_up(D, 128)
    B_sub = _round_up(B, 8)
    S_sub = _round_up(S, 8)
    D_sub = _round_up(D, 8)

    # Resident (single-buffered) bank + weight.
    resident = (B * S_sub * D_lane + D_sub * D_lane) * mm_itemsize
    headroom = 4 * 1024 * 1024          # spills / semaphores / compiler scratch
    avail = vmem_budget - resident - headroom

    # Per tgt-row cost: double-buffered q tile + double-buffered output tile.
    per_row = 2 * B * D_lane * mm_itemsize + 2 * B_sub * S_lane * out_itemsize

    if avail <= per_row * 8:
        bt = 8
    else:
        bt = min((int(avail // per_row) // 8) * 8, 256)
    bt = max(8, min(bt, _round_up(T, 8)))

    # v7x megacore: keep >= 2 grid steps on the 'parallel' tgt axis when possible.
    if T > 8 and _cdiv(T, bt) < 2:
        bt = max(8, _round_up(_cdiv(T, 2), 8))
    return bt


def _pointer_attn_kernel(q_ref, m_ref, w_ref, o_ref):
    # q_ref: (B, tT, D)   query tile              (matmul dtype)
    # m_ref: (B, S, D)    full memory bank        (matmul dtype, resident)
    # w_ref: (D, D)       linear_in weight, nn.Linear [out, in] layout
    # o_ref: (tT, B, S)   log-softmax output tile (out dtype)
    B, tT, D = q_ref.shape
    S = m_ref.shape[1]

    w = w_ref[...]

    # Projection hoisted out of the batch loop: ONE tall matmul per grid step.
    # Merging the two leading dims is layout-free (tT is a multiple of 8).
    q_all = q_ref[...].reshape(B * tT, D)
    # h_t = x @ W^T == contract the last dims of both operands (no transpose
    # of W is ever materialized; the MXU takes the contraction directly).
    qp = lax.dot_general(q_all, w, (((1,), (1,)), ((), ())),
                         preferred_element_type=jnp.float32)
    qp = qp.astype(m_ref.dtype).reshape(B, tT, D)

    # Scores + log-softmax per batch element, stored in sublane groups of 8 so
    # the output store is a dense (tT, 8, S) slab instead of B masked
    # single-sublane stores.
    # TODO(synk): for very large B, switch the group loop to lax.fori_loop to
    # bound code size / live ranges (and/or make B a grid axis, bank indexed
    # per b, to bound resident VMEM on 64-MiB v7x).
    GROUP = 8
    for b0 in range(0, B, GROUP):
        bs = min(GROUP, B - b0)
        group = []
        for b in range(b0, b0 + bs):
            # scores = h_t @ memory^T == contract last dims again (no .T).
            scores = lax.dot_general(qp[b], m_ref[b], (((1,), (1,)), ((), ())),
                                     preferred_element_type=jnp.float32)  # (tT, S)
            # Numerically stable log-softmax over the src axis (f32).
            mx = jnp.max(scores, axis=-1, keepdims=True)
            shifted = scores - mx
            lse = jnp.log(jnp.sum(jnp.exp(shifted), axis=-1, keepdims=True))
            group.append(shifted - lse)
        slab = jnp.stack(group, axis=1)                        # (tT, bs, S) f32
        o_ref[:, b0:b0 + bs, :] = slab.astype(o_ref.dtype)


def _build_call(B, T_pad, S, D, block_t, out_dtype, vmem_limit_bytes,
                resident_pipeline_mode):
    def _resident_spec(shape, index_map):
        if resident_pipeline_mode is None:
            return pl.BlockSpec(shape, index_map)
        return pl.BlockSpec(shape, index_map, pipeline_mode=resident_pipeline_mode)

    grid_spec = pltpu.PrefetchScalarGridSpec(
        num_scalar_prefetch=0,
        grid=(T_pad // block_t,),
        in_specs=[
            # query: tile over tgt_len, full batch + dim per block.
            pl.BlockSpec((B, block_t, D), lambda t: (0, t, 0)),
            # memory bank: constant block index -> fetched once, stays resident.
            # TODO(synk): for very long src_len, tile S as an innermost
            # "arbitrary" grid axis with an online log-softmax instead of
            # holding the whole (B, S, D) bank in VMEM (needed on 64-MiB v7x).
            _resident_spec((B, S, D), lambda t: (0, 0, 0)),
            # weight: constant block index -> fetched once.
            _resident_spec((D, D), lambda t: (0, 0)),
        ],
        out_specs=pl.BlockSpec((block_t, B, S), lambda t: (t, 0, 0)),
    )
    return pl.pallas_call(
        _pointer_attn_kernel,
        out_shape=jax.ShapeDtypeStruct((T_pad, B, S), out_dtype),
        grid_spec=grid_spec,
        compiler_params=pltpu.CompilerParams(
            dimension_semantics=("parallel",),
            vmem_limit_bytes=vmem_limit_bytes,
        ),
    )


def pointer_attention(inp, memory_bank, w_in, *,
                      matmul_dtype=jnp.bfloat16,
                      out_dtype=jnp.float32,
                      block_t=None,
                      vmem_limit_bytes=None):
    """
    Args:
      inp:         [batch, tgt_len, dim]  query vectors
      memory_bank: [batch, src_len, dim]  source vectors
      w_in:        [dim, dim]             linear_in weight ([out, in] layout)
    Returns:
      align_vectors: [tgt_len, batch, src_len] log-softmax attention scores.
    """
    B, T, D = inp.shape
    Bm, S, Dm = memory_bank.shape
    assert B == Bm and D == Dm and w_in.shape == (D, D)

    if vmem_limit_bytes is None:
        vmem_limit_bytes = _default_vmem_limit_bytes()

    # Cast only when needed; pass bf16 inputs to skip these HBM passes.
    # TODO(synk): for a memory bank reused across decode steps, pre-cast it
    # once outside this call instead of re-casting every step.
    q = inp if inp.dtype == matmul_dtype else inp.astype(matmul_dtype)
    m = memory_bank if memory_bank.dtype == matmul_dtype else memory_bank.astype(matmul_dtype)
    w = w_in if w_in.dtype == matmul_dtype else w_in.astype(matmul_dtype)

    if block_t is None:
        block_t = _pick_block_t(
            B, T, S, D,
            mm_itemsize=jnp.dtype(matmul_dtype).itemsize,
            out_itemsize=jnp.dtype(out_dtype).itemsize,
            vmem_budget=vmem_limit_bytes)
    block_t = max(8, _round_up(block_t, 8))
    T_pad = _round_up(T, block_t)
    if T_pad != T:
        q = jnp.pad(q, ((0, 0), (0, T_pad - T), (0, 0)))

    try:
        # Single-buffer the resident bank / weight blocks (constant index maps,
        # fetched exactly once): halves the VMEM held by the largest object.
        out = _build_call(B, T_pad, S, D, block_t, out_dtype, vmem_limit_bytes,
                          resident_pipeline_mode=pl.Buffered(1))(q, m, w)
    except Exception:
        # JAX/libtpu without BlockSpec.pipeline_mode support: fall back to the
        # default double buffering (correct, just uses more VMEM).
        out = _build_call(B, T_pad, S, D, block_t, out_dtype, vmem_limit_bytes,
                          resident_pipeline_mode=None)(q, m, w)

    if T_pad != T:
        out = out[:T]   # drop tgt padding (no-op when T % block_t == 0)
    return out


def _reference(inp, memory_bank, w_in):
    # Pure-JAX reference of the torch forward (f32).
    qp = jnp.einsum("btd,ed->bte", inp, w_in,
                    precision=jax.lax.Precision.HIGHEST)
    scores = jnp.einsum("bte,bse->bts", qp, memory_bank,
                        precision=jax.lax.Precision.HIGHEST)
    out = jax.nn.log_softmax(scores, axis=-1)
    return jnp.transpose(out, (1, 0, 2))


if __name__ == "__main__":
    batch, tgt_len, src_len, dim = 2, 8, 16, 32

    key = jax.random.PRNGKey(0)
    k1, k2, k3 = jax.random.split(key, 3)
    inp = jax.random.normal(k1, (batch, tgt_len, dim), dtype=jnp.float32)
    memory_bank = jax.random.normal(k2, (batch, src_len, dim), dtype=jnp.float32)
    # deterministic linear_in weight, nn.Linear layout [out_features, in_features]
    w_in = (jax.random.uniform(k3, (dim, dim), dtype=jnp.float32) - 0.5) * (2.0 / jnp.sqrt(dim))

    ref = _reference(inp, memory_bank, w_in)

    # 1) Exact-semantics check: f32 matmuls, tight tolerance.
    out_f32 = pointer_attention(inp, memory_bank, w_in, matmul_dtype=jnp.float32)
    out_f32 = jax.block_until_ready(out_f32)
    assert out_f32.shape == (tgt_len, batch, src_len)
    assert jnp.allclose(out_f32, ref, atol=2e-4, rtol=2e-4), \
        float(jnp.max(jnp.abs(out_f32 - ref)))

    # 2) Default fast path: bf16 MXU matmuls + f32 softmax, bf16-rounding tolerance.
    out_bf16 = pointer_attention(inp, memory_bank, w_in)
    out_bf16 = jax.block_until_ready(out_bf16)
    assert out_bf16.shape == (tgt_len, batch, src_len)
    assert jnp.allclose(out_bf16, ref, atol=0.15, rtol=0.1), \
        float(jnp.max(jnp.abs(out_bf16 - ref)))

    print("KERNEL_OK")
</pallas_src>

<mosaic_0001>
module attributes {stable_mosaic.version = 11 : i64} {
  func.func @_pointer_attn_kernel(%arg0: i32, %arg1: memref<2x8x32xf32, #tpu.memory_space<vmem>>, %arg2: memref<2x16x32xf32, #tpu.memory_space<vmem>>, %arg3: memref<32x32xf32, #tpu.memory_space<vmem>>, %arg4: memref<8x2x16xf32, #tpu.memory_space<vmem>>) attributes {dimension_semantics = [#tpu.dimension_semantics<parallel>], iteration_bounds = array<i64: 1>, scalar_prefetch = 0 : i64, scratch_operands = 0 : i64, tpu.core_type = #tpu.core_type<tc>, window_params = [{transform_indices = @transform_0, window_bounds = array<i64: 2, 8, 32>}, {pipeline_mode = #tpu.pipeline_mode<synchronous>, transform_indices = @transform_1, window_bounds = array<i64: 2, 16, 32>}, {pipeline_mode = #tpu.pipeline_mode<synchronous>, transform_indices = @transform_2, window_bounds = array<i64: 32, 32>}, {transform_indices = @transform_3, window_bounds = array<i64: 8, 2, 16>}]} {
    %c0 = arith.constant 0 : index
    %c0_0 = arith.constant 0 : index
    %0 = vector.load %arg3[%c0, %c0_0] : memref<32x32xf32, #tpu.memory_space<vmem>>, vector<32x32xf32>
    %c0_1 = arith.constant 0 : index
    %c0_2 = arith.constant 0 : index
    %c0_3 = arith.constant 0 : index
    %1 = vector.load %arg1[%c0_1, %c0_2, %c0_3] : memref<2x8x32xf32, #tpu.memory_space<vmem>>, vector<2x8x32xf32>
    %2 = vector.shape_cast %1 : vector<2x8x32xf32> to vector<16x32xf32>
    %cst = arith.constant dense<0.000000e+00> : vector<16x32xf32>
    %3 = tpu.matmul %2, %0, %cst {dimension_numbers = #tpu.dot_dimension_numbers<[1], [1], [0], [0], [0, 0, 1, 0], [], []>} : vector<16x32xf32>, vector<32x32xf32>, vector<16x32xf32> -> vector<16x32xf32>
    %4 = vector.shape_cast %3 : vector<16x32xf32> to vector<2x8x32xf32>
    %5 = vector.extract_strided_slice %4 {offsets = [0, 0, 0], sizes = [1, 8, 32], strides = [1, 1, 1]} : vector<2x8x32xf32> to vector<1x8x32xf32>
    %6 = vector.shape_cast %5 : vector<1x8x32xf32> to vector<8x32xf32>
    %c0_4 = arith.constant 0 : index
    %c0_5 = arith.constant 0 : index
    %c0_6 = arith.constant 0 : index
    %7 = vector.load %arg2[%c0_4, %c0_5, %c0_6] : memref<2x16x32xf32, #tpu.memory_space<vmem>>, vector<1x16x32xf32>
    %8 = vector.shape_cast %7 : vector<1x16x32xf32> to vector<16x32xf32>
    %cst_7 = arith.constant dense<0.000000e+00> : vector<8x16xf32>
    %9 = tpu.matmul %6, %8, %cst_7 {dimension_numbers = #tpu.dot_dimension_numbers<[1], [1], [0], [0], [0, 0, 1, 0], [], []>} : vector<8x32xf32>, vector<16x32xf32>, vector<8x16xf32> -> vector<8x16xf32>
    %cst_8 = arith.constant dense<0xFF800000> : vector<8xf32>
    %10 = vector.multi_reduction <maximumf>, %9, %cst_8 [1] : vector<8x16xf32> to vector<8xf32>
    %11 = vector.shape_cast %10 : vector<8xf32> to vector<8x1xf32>
    %12 = vector.broadcast %11 : vector<8x1xf32> to vector<8x16xf32>
    %13 = arith.subf %9, %12 : vector<8x16xf32>
    %14 = math.exp %13 : vector<8x16xf32>
    %cst_9 = arith.constant dense<0.000000e+00> : vector<8xf32>
    %15 = vector.multi_reduction <add>, %14, %cst_9 [1] : vector<8x16xf32> to vector<8xf32>
    %16 = vector.shape_cast %15 : vector<8xf32> to vector<8x1xf32>
    %17 = math.log %16 : vector<8x1xf32>
    %18 = vector.broadcast %17 : vector<8x1xf32> to vector<8x16xf32>
    %19 = arith.subf %13, %18 : vector<8x16xf32>
    %20 = vector.extract_strided_slice %4 {offsets = [1, 0, 0], sizes = [1, 8, 32], strides = [1, 1, 1]} : vector<2x8x32xf32> to vector<1x8x32xf32>
    %21 = vector.shape_cast %20 : vector<1x8x32xf32> to vector<8x32xf32>
    %c1 = arith.constant 1 : index
    %c0_10 = arith.constant 0 : index
    %c0_11 = arith.constant 0 : index
    %22 = vector.load %arg2[%c1, %c0_10, %c0_11] : memref<2x16x32xf32, #tpu.memory_space<vmem>>, vector<1x16x32xf32>
    %23 = vector.shape_cast %22 : vector<1x16x32xf32> to vector<16x32xf32>
    %cst_12 = arith.constant dense<0.000000e+00> : vector<8x16xf32>
    %24 = tpu.matmul %21, %23, %cst_12 {dimension_numbers = #tpu.dot_dimension_numbers<[1], [1], [0], [0], [0, 0, 1, 0], [], []>} : vector<8x32xf32>, vector<16x32xf32>, vector<8x16xf32> -> vector<8x16xf32>
    %cst_13 = arith.constant dense<0xFF800000> : vector<8xf32>
    %25 = vector.multi_reduction <maximumf>, %24, %cst_13 [1] : vector<8x16xf32> to vector<8xf32>
    %26 = vector.shape_cast %25 : vector<8xf32> to vector<8x1xf32>
    %27 = vector.broadcast %26 : vector<8x1xf32> to vector<8x16xf32>
    %28 = arith.subf %24, %27 : vector<8x16xf32>
    %29 = math.exp %28 : vector<8x16xf32>
    %cst_14 = arith.constant dense<0.000000e+00> : vector<8xf32>
    %30 = vector.multi_reduction <add>, %29, %cst_14 [1] : vector<8x16xf32> to vector<8xf32>
    %31 = vector.shape_cast %30 : vector<8xf32> to vector<8x1xf32>
    %32 = math.log %31 : vector<8x1xf32>
    %33 = vector.broadcast %32 : vector<8x1xf32> to vector<8x16xf32>
    %34 = arith.subf %28, %33 : vector<8x16xf32>
    %35 = vector.shape_cast %19 : vector<8x16xf32> to vector<8x1x16xf32>
    %36 = vector.shape_cast %34 : vector<8x16xf32> to vector<8x1x16xf32>
    %37 = tpu.concatenate %35, %36 in 1 : vector<8x1x16xf32>, vector<8x1x16xf32> -> vector<8x2x16xf32>
    %c0_15 = arith.constant 0 : index
    %c0_16 = arith.constant 0 : index
    %c0_17 = arith.constant 0 : index
    %38 = vector.load %arg4[%c0_15, %c0_16, %c0_17] : memref<8x2x16xf32, #tpu.memory_space<vmem>>, vector<8x2x16xf32>
    tpu.vector_store %arg4[%c0_15, %c0_16, %c0_17], %37 {strides = array<i32>} : memref<8x2x16xf32, #tpu.memory_space<vmem>>, vector<8x2x16xf32>,
    return
  }
  func.func @transform_0(%arg0: i32) -> (i32, i32, i32) {
    %c0_i32 = arith.constant 0 : i32
    %c0_i32_0 = arith.constant 0 : i32
    %c0_i32_1 = arith.constant 0 : i32
    return %c0_i32, %arg0, %c0_i32_0 : i32, i32, i32
  }
  func.func @transform_1(%arg0: i32) -> (i32, i32, i32) {
    %c0_i32 = arith.constant 0 : i32
    %c0_i32_0 = arith.constant 0 : i32
    %c0_i32_1 = arith.constant 0 : i32
    %c0_i32_2 = arith.constant 0 : i32
    return %c0_i32, %c0_i32_0, %c0_i32_1 : i32, i32, i32
  }
  func.func @transform_2(%arg0: i32) -> (i32, i32) {
    %c0_i32 = arith.constant 0 : i32
    %c0_i32_0 = arith.constant 0 : i32
    %c0_i32_1 = arith.constant 0 : i32
    return %c0_i32, %c0_i32_0 : i32, i32
  }
  func.func @transform_3(%arg0: i32) -> (i32, i32, i32) {
    %c0_i32 = arith.constant 0 : i32
    %c0_i32_0 = arith.constant 0 : i32
    %c0_i32_1 = arith.constant 0 : i32
    return %arg0, %c0_i32, %c0_i32_0 : i32, i32, i32
  }
}

module attributes {stable_mosaic.version = 11 : i64} {
  func.func @_pointer_attn_kernel(%arg0: i32, %arg1: memref<2x8x32xf32, #tpu.memory_space<vmem>>, %arg2: memref<2x16x32xf32, #tpu.memory_space<vmem>>, %arg3: memref<32x32xf32, #tpu.memory_space<vmem>>, %arg4: memref<8x2x16xf32, #tpu.memory_space<vmem>>) attributes {dimension_semantics = [#tpu.dimension_semantics<parallel>], iteration_bounds = array<i64: 1>, scalar_prefetch = 0 : i64, scratch_operands = 0 : i64, tpu.core_type = #tpu.core_type<tc>, window_params = [{transform_indices = @transform_0, window_bounds = array<i64: 2, 8, 32>}, {pipeline_mode = #tpu.pipeline_mode<synchronous>, transform_indices = @transform_1, window_bounds = array<i64: 2, 16, 32>}, {pipeline_mode = #tpu.pipeline_mode<synchronous>, transform_indices = @transform_2, window_bounds = array<i64: 32, 32>}, {transform_indices = @transform_3, window_bounds = array<i64: 8, 2, 16>}]} {
    %c0 = arith.constant 0 : index
    %c0_0 = arith.constant 0 : index
    %0 = vector.load %arg3[%c0, %c0_0] : memref<32x32xf32, #tpu.memory_space<vmem>>, vector<32x32xf32>
    %c0_1 = arith.constant 0 : index
    %c0_2 = arith.constant 0 : index
    %c0_3 = arith.constant 0 : index
    %1 = vector.load %arg1[%c0_1, %c0_2, %c0_3] : memref<2x8x32xf32, #tpu.memory_space<vmem>>, vector<2x8x32xf32>
    %2 = vector.shape_cast %1 : vector<2x8x32xf32> to vector<16x32xf32>
    %cst = arith.constant dense<0.000000e+00> : vector<16x32xf32>
    %3 = tpu.matmul %2, %0, %cst {dimension_numbers = #tpu.dot_dimension_numbers<[1], [1], [0], [0], [0, 0, 1, 0], [], []>} : vector<16x32xf32>, vector<32x32xf32>, vector<16x32xf32> -> vector<16x32xf32>
    %4 = vector.shape_cast %3 : vector<16x32xf32> to vector<2x8x32xf32>
    %5 = vector.extract_strided_slice %4 {offsets = [0, 0, 0], sizes = [1, 8, 32], strides = [1, 1, 1]} : vector<2x8x32xf32> to vector<1x8x32xf32>
    %6 = vector.shape_cast %5 : vector<1x8x32xf32> to vector<8x32xf32>
    %c0_4 = arith.constant 0 : index
    %c0_5 = arith.constant 0 : index
    %c0_6 = arith.constant 0 : index
    %7 = vector.load %arg2[%c0_4, %c0_5, %c0_6] : memref<2x16x32xf32, #tpu.memory_space<vmem>>, vector<1x16x32xf32>
    %8 = vector.shape_cast %7 : vector<1x16x32xf32> to vector<16x32xf32>
    %cst_7 = arith.constant dense<0.000000e+00> : vector<8x16xf32>
    %9 = tpu.matmul %6, %8, %cst_7 {dimension_numbers = #tpu.dot_dimension_numbers<[1], [1], [0], [0], [0, 0, 1, 0], [], []>} : vector<8x32xf32>, vector<16x32xf32>, vector<8x16xf32> -> vector<8x16xf32>
    %cst_8 = arith.constant dense<0xFF800000> : vector<8xf32>
    %10 = vector.multi_reduction <maximumf>, %9, %cst_8 [1] : vector<8x16xf32> to vector<8xf32>
    %11 = vector.shape_cast %10 : vector<8xf32> to vector<8x1xf32>
    %12 = vector.broadcast %11 : vector<8x1xf32> to vector<8x16xf32>
    %13 = arith.subf %9, %12 : vector<8x16xf32>
    %14 = math.exp %13 : vector<8x16xf32>
    %cst_9 = arith.constant dense<0.000000e+00> : vector<8xf32>
    %15 = vector.multi_reduction <add>, %14, %cst_9 [1] : vector<8x16xf32> to vector<8xf32>
    %16 = vector.shape_cast %15 : vector<8xf32> to vector<8x1xf32>
    %17 = math.log %16 : vector<8x1xf32>
    %18 = vector.broadcast %17 : vector<8x1xf32> to vector<8x16xf32>
    %19 = arith.subf %13, %18 : vector<8x16xf32>
    %20 = vector.extract_strided_slice %4 {offsets = [1, 0, 0], sizes = [1, 8, 32], strides = [1, 1, 1]} : vector<2x8x32xf32> to vector<1x8x32xf32>
    %21 = vector.shape_cast %20 : vector<1x8x32xf32> to vector<8x32xf32>
    %c1 = arith.constant 1 : index
    %c0_10 = arith.constant 0 : index
    %c0_11 = arith.constant 0 : index
    %22 = vector.load %arg2[%c1, %c0_10, %c0_11] : memref<2x16x32xf32, #tpu.memory_space<vmem>>, vector<1x16x32xf32>
    %23 = vector.shape_cast %22 : vector<1x16x32xf32> to vector<16x32xf32>
    %cst_12 = arith.constant dense<0.000000e+00> : vector<8x16xf32>
    %24 = tpu.matmul %21, %23, %cst_12 {dimension_numbers = #tpu.dot_dimension_numbers<[1], [1], [0], [0], [0, 0, 1, 0], [], []>} : vector<8x32xf32>, vector<16x32xf32>, vector<8x16xf32> -> vector<8x16xf32>
    %cst_13 = arith.constant dense<0xFF800000> : vector<8xf32>
    %25 = vector.multi_reduction <maximumf>, %24, %cst_13 [1] : vector<8x16xf32> to vector<8xf32>
    %26 = vector.shape_cast %25 : vector<8xf32> to vector<8x1xf32>
    %27 = vector.broadcast %26 : vector<8x1xf32> to vector<8x16xf32>
    %28 = arith.subf %24, %27 : vector<8x16xf32>
    %29 = math.exp %28 : vector<8x16xf32>
    %cst_14 = arith.constant dense<0.000000e+00> : vector<8xf32>
    %30 = vector.multi_reduction <add>, %29, %cst_14 [1] : vector<8x16xf32> to vector<8xf32>
    %31 = vector.shape_cast %30 : vector<8xf32> to vector<8x1xf32>
    %32 = math.log %31 : vector<8x1xf32>
    %33 = vector.broadcast %32 : vector<8x1xf32> to vector<8x16xf32>
    %34 = arith.subf %28, %33 : vector<8x16xf32>
    %35 = vector.shape_cast %19 : vector<8x16xf32> to vector<8x1x16xf32>
    %36 = vector.shape_cast %34 : vector<8x16xf32> to vector<8x1x16xf32>
    %37 = tpu.concatenate %35, %36 in 1 : vector<8x1x16xf32>, vector<8x1x16xf32> -> vector<8x2x16xf32>
    %c0_15 = arith.constant 0 : index
    %c0_16 = arith.constant 0 : index
    %c0_17 = arith.constant 0 : index
    %38 = vector.load %arg4[%c0_15, %c0_16, %c0_17] : memref<8x2x16xf32, #tpu.memory_space<vmem>>, vector<8x2x16xf32>
    tpu.vector_store %arg4[%c0_15, %c0_16, %c0_17], %37 {strides = array<i32>} : memref<8x2x16xf32, #tpu.memory_space<vmem>>, vector<8x2x16xf32>,
    return
  }
  func.func @transform_0(%arg0: i32) -> (i32, i32, i32) {
    %c0_i32 = arith.constant 0 : i32
    %c0_i32_0 = arith.constant 0 : i32
    %c0_i32_1 = arith.constant 0 : i32
    return %c0_i32, %arg0, %c0_i32_0 : i32, i32, i32
  }
  func.func @transform_1(%arg0: i32) -> (i32, i32, i32) {
    %c0_i32 = arith.constant 0 : i32
    %c0_i32_0 = arith.constant 0 : i32
    %c0_i32_1 = arith.constant 0 : i32
    %c0_i32_2 = arith.constant 0 : i32
    return %c0_i32, %c0_i32_0, %c0_i32_1 : i32, i32, i32
  }
  func.func @transform_2(%arg0: i32) -> (i32, i32) {
    %c0_i32 = arith.constant 0 : i32
    %c0_i32_0 = arith.constant 0 : i32
    %c0_i32_1 = arith.constant 0 : i32
    return %c0_i32, %c0_i32_0 : i32, i32
  }
  func.func @transform_3(%arg0: i32) -> (i32, i32, i32) {
    %c0_i32 = arith.constant 0 : i32
    %c0_i32_0 = arith.constant 0 : i32
    %c0_i32_1 = arith.constant 0 : i32
    return %arg0, %c0_i32, %c0_i32_0 : i32, i32, i32
  }
}

</mosaic_0001>

<llo_original>
// kernel: tpu_custom_call.1
$region0: #{tpu_custom_call.1}
  #allocation0 [shape = 'u32[]', space=smem, size = 0x4, offset = 0x4, fixed_abs, tag = 'smem constant byte address 0x4 - core index']
  #allocation1 [shape = 'u32[144,128]{1,0:T(1,128)}', space=vmem, size = 0x12000, scoped, tag = 'internal scratch']
  %s0 = inlined_call_operand.hbm [shape: f32[2,8,32], index: 0, kind: input, shape index: {}]
  %s1 = inlined_call_operand.hbm [shape: f32[2,16,32], index: 1, kind: input, shape index: {}]
  %s2 = inlined_call_operand.hbm [shape: f32[32,32], index: 2, kind: input, shape index: {}]
  %s3 = inlined_call_operand.hbm [shape: f32[8,2,16], index: 3, kind: output, shape index: {}]
  %s4 = sld [smem:[#allocation0]]
  $region34: #{tpu_custom_call.1} parent=0
    _
  %s6 = ssub.s32 1, %s4
  %s7 = scalar_select 0, %s6, %s4
  $region1: #{tpu_custom_call.1} parent=0
    #allocation2 [shape = 'u8[8192]{0}', space=vmem, size = 0x2000, scoped, tag = 'input window, operand 0, single buffered']
    #allocation3 [shape = 's32[1]{0}', space=sflag, size = 0x4, scoped, tag = 'scoped memory for tpu_custom_call.1']
    #allocation4 [shape = 's32[1]{0}', space=sflag, size = 0x4, scoped, tag = 'scoped memory for tpu_custom_call.1']
    #allocation5 [shape = 'u8[16384]{0}', space=vmem, size = 0x4000, scoped, tag = 'input window, operand 1, single buffered']
    #allocation6 [shape = 's32[1]{0}', space=sflag, size = 0x4, scoped, tag = 'scoped memory for tpu_custom_call.1']
    #allocation7 [shape = 'u8[16384]{0}', space=vmem, size = 0x4000, scoped, tag = 'input window, operand 2, single buffered']
    #allocation8 [shape = 'u8[8192]{0}', space=vmem, size = 0x2000, scoped, tag = 'output window, operand 0, single buffered']
    %8 = vsyncpa [#allocation3], 0
    %9 = vsyncpa [#allocation6], 0
    %10 = vsyncpa [#allocation4], 0
    // Predicated region
    $region2: #{tpu_custom_call.1} parent=1 // pred_check
      _
    $region3: #{tpu_custom_call.1} parent=1 // pred_check_branch
      %12 = sbr.rel (0) target = $region5
    $region4: #{tpu_custom_call.1} parent=1 // pred_region
      %s14 = ssub.s32 256, 256
      %15 = vsyncadd [#allocation3], %s14
      %s16 = sshll.u32 [#allocation2], 4
      %s17 = int_to_ptr.vmem [resolvable:$true] %s16
      %22 = dma.hbm_to_vmem [thread:$0]  %s0, 256, %s17, [#allocation3], 128, 128, 8
    $region5: #{tpu_custom_call.1} parent=1 // pred_fallthru
      _
    // Predicated region
    $region6: #{tpu_custom_call.1} parent=1 // pred_check
      _
    $region7: #{tpu_custom_call.1} parent=1 // pred_check_branch
      %24 = sbr.rel (0) target = $region9
    $region8: #{tpu_custom_call.1} parent=1 // pred_region
      %s26 = ssub.s32 512, 512
      %27 = vsyncadd [#allocation6], %s26
      %s28 = sshll.u32 [#allocation5], 4
      %s29 = int_to_ptr.vmem [resolvable:$true] %s28
      %34 = dma.hbm_to_vmem [thread:$0]  %s1, 512, %s29, [#allocation6], 128, 128, 8
    $region9: #{tpu_custom_call.1} parent=1 // pred_fallthru
      _
    // Predicated region
    $region10: #{tpu_custom_call.1} parent=1 // pred_check
      _
    $region11: #{tpu_custom_call.1} parent=1 // pred_check_branch
      %36 = sbr.rel (0) target = $region13
    $region12: #{tpu_custom_call.1} parent=1 // pred_region
      %s38 = ssub.s32 512, 512
      %39 = vsyncadd [#allocation6], %s38
      %s40 = sshll.u32 [#allocation7], 4
      %s41 = int_to_ptr.vmem [resolvable:$true] %s40
      %46 = dma.hbm_to_vmem [thread:$0]  %s2, 512, %s41, [#allocation6], 128, 128, 8
    $region13: #{tpu_custom_call.1} parent=1 // pred_fallthru
      _
    // Predicated region
    $region14: #{tpu_custom_call.1} parent=1 // pred_check
      _
    $region15: #{tpu_custom_call.1} parent=1 // pred_check_branch
      %48 = sbr.rel (0) target = $region17
    $region16: #{tpu_custom_call.1} parent=1 // pred_region
      %49 = dma.done [#allocation3], 256
    $region17: #{tpu_custom_call.1} parent=1 // pred_fallthru
      _
    // Predicated region
    $region18: #{tpu_custom_call.1} parent=1 // pred_check
      _
    $region19: #{tpu_custom_call.1} parent=1 // pred_check_branch
      %51 = sbr.rel (0) target = $region21
    $region20: #{tpu_custom_call.1} parent=1 // pred_region
      %52 = dma.done [#allocation6], 512
    $region21: #{tpu_custom_call.1} parent=1 // pred_fallthru
      _
    // Predicated region
    $region22: #{tpu_custom_call.1} parent=1 // pred_check
      _
    $region23: #{tpu_custom_call.1} parent=1 // pred_check_branch
      %54 = sbr.rel (0) target = $region25
    $region24: #{tpu_custom_call.1} parent=1 // pred_region
      %55 = dma.done [#allocation6], 512
    $region25: #{tpu_custom_call.1} parent=1 // pred_fallthru
      _
    %v56 = vld [vmem:[#allocation7] sm:$0xff]
    %v57 = vld [vmem:[#allocation7 + $0x8] sm:$0xff]
    %v58 = vld [vmem:[#allocation7 + $0x10] sm:$0xff]
    %v59 = vld [vmem:[#allocation7 + $0x18] sm:$0xff]
    %v60 = vld [vmem:[#allocation2] sm:$0xff]
    %v61 = vld [vmem:[#allocation2 + $0x8] sm:$0xff]
    %vm62 = vcmask 261120
    %v64 = vsel %vm62, %v60, 0
    %v67 = vsel %vm62, %v61, 0
    %v70 = vsel %vm62, %v56, 0
    %v73 = vsel %vm62, %v57, 0
    %v76 = vsel %vm62, %v58, 0
    %v79 = vsel %vm62, %v59, 0
    %81 = vmatprep.subr.mxu0 0.0
    %82 = vmatpush1.xpose.msra.mxu0 %v70
    %83 = vmatprep.subr.mxu0 0.0
    %84 = vmatpush1.xpose.msra.mxu0 %v73
    %85 = vmatprep.subr.mxu0 0.0
    %86 = vmatpush1.xpose.msra.mxu0 %v76
    %87 = vmatprep.subr.mxu0 0.0
    %88 = vmatpush1.xpose.msra.mxu0 %v79
    %89 = vmatprep.subr.mxu0 0.0
    %90 = vmatpush1.xpose.msra.mxu0 0.0
    %91 = vmatprep.subr.mxu0 0.0
    %92 = vmatpush1.xpose.msra.mxu0 0.0
    %93 = vmatprep.subr.mxu0 0.0
    %94 = vmatpush1.xpose.msra.mxu0 0.0
    %95 = vmatprep.subr.mxu0 0.0
    %96 = vmatpush1.xpose.msra.mxu0 0.0
    %97 = vmatprep.subr.mxu0 0.0
    %98 = vmatpush1.xpose.msra.mxu0 0.0
    %99 = vmatprep.subr.mxu0 0.0
    %100 = vmatpush1.xpose.msra.mxu0 0.0
    %101 = vmatprep.subr.mxu0 0.0
    %102 = vmatpush1.xpose.msra.mxu0 0.0
    %103 = vmatprep.subr.mxu0 0.0
    %104 = vmatpush1.xpose.msra.mxu0 0.0
    %105 = vmatprep.subr.mxu0 0.0
    %106 = vmatpush1.xpose.msra.mxu0 0.0
    %107 = vmatprep.subr.mxu0 0.0
    %108 = vmatpush1.xpose.msra.mxu0 0.0
    %109 = vmatprep.subr.mxu0 0.0
    %110 = vmatpush1.xpose.msra.mxu0 0.0
    %111 = vmatprep.subr.mxu0 0.0
    %112 = vmatpush1.xpose.msra.mxu0 0.0
    %113 = vmatprep.subr.mxu0 0.0
    %114 = vmatpush1.xpose.msra.mxu0 0.0
    %115 = vmatprep.subr.mxu0 0.0
    %116 = vmatpush1.xpose.msra.mxu0 0.0
    %117 = vmatprep.subr.mxu0 0.0
    %118 = vmatpush1.xpose.msra.mxu0 0.0
    %119 = vmatprep.subr.mxu0 0.0
    %120 = vmatpush1.xpose.msra.mxu0 0.0
    %121 = vmatprep.subr.mxu0 0.0
    %122 = vmatpush1.xpose.msra.mxu0 0.0
    %123 = vmatprep.subr.mxu0 0.0
    %124 = vmatpush1.xpose.msra.mxu0 0.0
    %125 = vmatprep.subr.mxu0 0.0
    %126 = vmatpush1.xpose.msra.mxu0 0.0
    %127 = vmatprep.subr.mxu0 0.0
    %128 = vmatpush1.xpose.msra.mxu0 0.0
    %129 = vmatprep.subr.mxu0 0.0
    %130 = vmatpush1.xpose.msra.mxu0 0.0
    %131 = vmatprep.subr.mxu0 0.0
    %132 = vmatpush1.xpose.msra.mxu0 0.0
    %133 = vmatprep.subr.mxu0 0.0
    %134 = vmatpush1.xpose.msra.mxu0 0.0
    %135 = vmatprep.subr.mxu0 0.0
    %136 = vmatpush1.xpose.msra.mxu0 0.0
    %137 = vmatprep.subr.mxu0 0.0
    %138 = vmatpush1.xpose.msra.mxu0 0.0
    %139 = vmatprep.subr.mxu0 0.0
    %140 = vmatpush1.xpose.msra.mxu0 0.0
    %141 = vmatprep.subr.mxu0 0.0
    %142 = vmatpush1.xpose.msra.mxu0 0.0
    %143 = vmatprep.subr.mxu0 0.0
    %144 = vmatpush1.xpose.msra.mxu0 0.0
    %145 = vmatprep.mubr.f32.mxu0 0.0
    %146 = vmatmul.mubr.f32.gmra.mrb[0].mxu0 %v64
    %v147 = vpop.f32.mrb[0].mxu0
    %v148 = vadd.f32 0.0, %v147
    %v149 = vpop.f32.mrb[0].mxu0
    %150 = vmatprep.mubr.f32.mxu0 0.0
    %151 = vmatmul.mubr.f32.gmra.mrb[0].mxu0 %v67
    %v152 = vpop.f32.mrb[0].mxu0
    %v153 = vadd.f32 0.0, %v152
    %v154 = vpop.f32.mrb[0].mxu0
    %155 = vdwg.mxu0
    %v156 = vld [vmem:[#allocation5] sm:$0xff]
    %v157 = vld [vmem:[#allocation5 + $0x8] sm:$0xff]
    %v159 = vsel %vm62, %v148, 0
    %v162 = vsel %vm62, %v156, 0
    %v165 = vsel %vm62, %v157, 0
    %167 = vmatprep.subr.mxu0 0.0
    %168 = vmatpush1.xpose.msra.mxu0 %v162
    %169 = vmatprep.subr.mxu0 0.0
    %170 = vmatpush1.xpose.msra.mxu0 %v165
    %171 = vmatprep.subr.mxu0 0.0
    %172 = vmatpush1.xpose.msra.mxu0 0.0
    %173 = vmatprep.subr.mxu0 0.0
    %174 = vmatpush1.xpose.msra.mxu0 0.0
    %175 = vmatprep.subr.mxu0 0.0
    %176 = vmatpush1.xpose.msra.mxu0 0.0
    %177 = vmatprep.subr.mxu0 0.0
    %178 = vmatpush1.xpose.msra.mxu0 0.0
    %179 = vmatprep.subr.mxu0 0.0
    %180 = vmatpush1.xpose.msra.mxu0 0.0
    %181 = vmatprep.subr.mxu0 0.0
    %182 = vmatpush1.xpose.msra.mxu0 0.0
    %183 = vmatprep.subr.mxu0 0.0
    %184 = vmatpush1.xpose.msra.mxu0 0.0
    %185 = vmatprep.subr.mxu0 0.0
    %186 = vmatpush1.xpose.msra.mxu0 0.0
    %187 = vmatprep.subr.mxu0 0.0
    %188 = vmatpush1.xpose.msra.mxu0 0.0
    %189 = vmatprep.subr.mxu0 0.0
    %190 = vmatpush1.xpose.msra.mxu0 0.0
    %191 = vmatprep.subr.mxu0 0.0
    %192 = vmatpush1.xpose.msra.mxu0 0.0
    %193 = vmatprep.subr.mxu0 0.0
    %194 = vmatpush1.xpose.msra.mxu0 0.0
    %195 = vmatprep.subr.mxu0 0.0
    %196 = vmatpush1.xpose.msra.mxu0 0.0
    %197 = vmatprep.subr.mxu0 0.0
    %198 = vmatpush1.xpose.msra.mxu0 0.0
    %199 = vmatprep.subr.mxu0 0.0
    %200 = vmatpush1.xpose.msra.mxu0 0.0
    %201 = vmatprep.subr.mxu0 0.0
    %202 = vmatpush1.xpose.msra.mxu0 0.0
    %203 = vmatprep.subr.mxu0 0.0
    %204 = vmatpush1.xpose.msra.mxu0 0.0
    %205 = vmatprep.subr.mxu0 0.0
    %206 = vmatpush1.xpose.msra.mxu0 0.0
    %207 = vmatprep.subr.mxu0 0.0
    %208 = vmatpush1.xpose.msra.mxu0 0.0
    %209 = vmatprep.subr.mxu0 0.0
    %210 = vmatpush1.xpose.msra.mxu0 0.0
    %211 = vmatprep.subr.mxu0 0.0
    %212 = vmatpush1.xpose.msra.mxu0 0.0
    %213 = vmatprep.subr.mxu0 0.0
    %214 = vmatpush1.xpose.msra.mxu0 0.0
    %215 = vmatprep.subr.mxu0 0.0
    %216 = vmatpush1.xpose.msra.mxu0 0.0
    %217 = vmatprep.subr.mxu0 0.0
    %218 = vmatpush1.xpose.msra.mxu0 0.0
    %219 = vmatprep.subr.mxu0 0.0
    %220 = vmatpush1.xpose.msra.mxu0 0.0
    %221 = vmatprep.subr.mxu0 0.0
    %222 = vmatpush1.xpose.msra.mxu0 0.0
    %223 = vmatprep.subr.mxu0 0.0
    %224 = vmatpush1.xpose.msra.mxu0 0.0
    %225 = vmatprep.subr.mxu0 0.0
    %226 = vmatpush1.xpose.msra.mxu0 0.0
    %227 = vmatprep.subr.mxu0 0.0
    %228 = vmatpush1.xpose.msra.mxu0 0.0
    %229 = vmatprep.subr.mxu0 0.0
    %230 = vmatpush1.xpose.msra.mxu0 0.0
    %231 = vmatprep.mubr.f32.mxu0 0.0
    %232 = vmatmul.mubr.f32.gmra.mrb[0].mxu0 %v159
    %v233 = vpop.f32.mrb[0].mxu0
    %v234 = vadd.f32 0.0, %v233
    %v235 = vpop.f32.mrb[0].mxu0
    %236 = vdwg.mxu0
    %vm237 = vcmask 130048
    %v238 = vsel %vm237, %v234, -inf
    %239 = vmax.xlane.f32.xlu0 %v238
    %v240 = vpop.xlane.xlu0 %239
    %v241 = vsub.f32 %v234, %v240
    %v242 = vmul.f32 %v241, 1.442695
    %v243 = vpow.pop %v242
    %v244 = vsel %vm237, %v243, 0.0
    %245 = vadd.xlane.f32.xlu0 %v244
    %v246 = vpop.xlane.xlu0 %245
    %v247 = vlog2.pop %v246
    %v248 = vmul.f32 %v247, 0.6931472
    %v249 = vsub.f32 %v241, %v248
    %s250 = scalar_lea.vmem [#allocation5], 16
    %v251 = vld [vmem:[%s250] sm:$0xff]
    %v252 = vld [vmem:[%s250 + $0x8] sm:$0xff]
    %v254 = vsel %vm62, %v153, 0
    %v257 = vsel %vm62, %v251, 0
    %v260 = vsel %vm62, %v252, 0
    %262 = vmatprep.subr.mxu0 0.0
    %263 = vmatpush1.xpose.msra.mxu0 %v257
    %264 = vmatprep.subr.mxu0 0.0
    %265 = vmatpush1.xpose.msra.mxu0 %v260
    %266 = vmatprep.subr.mxu0 0.0
    %267 = vmatpush1.xpose.msra.mxu0 0.0
    %268 = vmatprep.subr.mxu0 0.0
    %269 = vmatpush1.xpose.msra.mxu0 0.0
    %270 = vmatprep.subr.mxu0 0.0
    %271 = vmatpush1.xpose.msra.mxu0 0.0
    %272 = vmatprep.subr.mxu0 0.0
    %273 = vmatpush1.xpose.msra.mxu0 0.0
    %274 = vmatprep.subr.mxu0 0.0
    %275 = vmatpush1.xpose.msra.mxu0 0.0
    %276 = vmatprep.subr.mxu0 0.0
    %277 = vmatpush1.xpose.msra.mxu0 0.0
    %278 = vmatprep.subr.mxu0 0.0
    %279 = vmatpush1.xpose.msra.mxu0 0.0
    %280 = vmatprep.subr.mxu0 0.0
    %281 = vmatpush1.xpose.msra.mxu0 0.0
    %282 = vmatprep.subr.mxu0 0.0
    %283 = vmatpush1.xpose.msra.mxu0 0.0
    %284 = vmatprep.subr.mxu0 0.0
    %285 = vmatpush1.xpose.msra.mxu0 0.0
    %286 = vmatprep.subr.mxu0 0.0
    %287 = vmatpush1.xpose.msra.mxu0 0.0
    %288 = vmatprep.subr.mxu0 0.0
    %289 = vmatpush1.xpose.msra.mxu0 0.0
    %290 = vmatprep.subr.mxu0 0.0
    %291 = vmatpush1.xpose.msra.mxu0 0.0
    %292 = vmatprep.subr.mxu0 0.0
    %293 = vmatpush1.xpose.msra.mxu0 0.0
    %294 = vmatprep.subr.mxu0 0.0
    %295 = vmatpush1.xpose.msra.mxu0 0.0
    %296 = vmatprep.subr.mxu0 0.0
    %297 = vmatpush1.xpose.msra.mxu0 0.0
    %298 = vmatprep.subr.mxu0 0.0
    %299 = vmatpush1.xpose.msra.mxu0 0.0
    %300 = vmatprep.subr.mxu0 0.0
    %301 = vmatpush1.xpose.msra.mxu0 0.0
    %302 = vmatprep.subr.mxu0 0.0
    %303 = vmatpush1.xpose.msra.mxu0 0.0
    %304 = vmatprep.subr.mxu0 0.0
    %305 = vmatpush1.xpose.msra.mxu0 0.0
    %306 = vmatprep.subr.mxu0 0.0
    %307 = vmatpush1.xpose.msra.mxu0 0.0
    %308 = vmatprep.subr.mxu0 0.0
    %309 = vmatpush1.xpose.msra.mxu0 0.0
    %310 = vmatprep.subr.mxu0 0.0
    %311 = vmatpush1.xpose.msra.mxu0 0.0
    %312 = vmatprep.subr.mxu0 0.0
    %313 = vmatpush1.xpose.msra.mxu0 0.0
    %314 = vmatprep.subr.mxu0 0.0
    %315 = vmatpush1.xpose.msra.mxu0 0.0
    %316 = vmatprep.subr.mxu0 0.0
    %317 = vmatpush1.xpose.msra.mxu0 0.0
    %318 = vmatprep.subr.mxu0 0.0
    %319 = vmatpush1.xpose.msra.mxu0 0.0
    %320 = vmatprep.subr.mxu0 0.0
    %321 = vmatpush1.xpose.msra.mxu0 0.0
    %322 = vmatprep.subr.mxu0 0.0
    %323 = vmatpush1.xpose.msra.mxu0 0.0
    %324 = vmatprep.subr.mxu0 0.0
    %325 = vmatpush1.xpose.msra.mxu0 0.0
    %326 = vmatprep.mubr.f32.mxu0 0.0
    %327 = vmatmul.mubr.f32.gmra.mrb[0].mxu0 %v254
    %v328 = vpop.f32.mrb[0].mxu0
    %v329 = vadd.f32 0.0, %v328
    %v330 = vpop.f32.mrb[0].mxu0
    %331 = vdwg.mxu0
    %v332 = vsel %vm237, %v329, -inf
    %333 = vmax.xlane.f32.xlu0 %v332
    %v334 = vpop.xlane.xlu0 %333
    %v335 = vsub.f32 %v329, %v334
    %v336 = vmul.f32 %v335, 1.442695
    %v337 = vpow.pop %v336
    %v338 = vsel %vm237, %v337, 0.0
    %339 = vadd.xlane.f32.xlu0 %v338
    %v340 = vpop.xlane.xlu0 %339
    %v341 = vlog2.pop %v340
    %v342 = vmul.f32 %v341, 0.6931472
    %v343 = vsub.f32 %v335, %v342
    %v345 = vcombine.high %v249, %v249
    %v347 = vunpack.c.l.s4 1966171168
    %v348 = vunpack.c.0.s8 %v347
    %v349 = vlaneseq
    %v350 = vshrl.u32 %v349, 7
    %v351 = vsub.s32 %v348, %v350
    %v352 = vrot.slane %v249, %v351
    %v354 = vunpack.c.l.s4 1966171168
    %v355 = vunpack.c.0.s8 %v354
    %v356 = vlaneseq
    %v357 = vshrl.u32 %v356, 7
    %v358 = vsub.s32 %v355, %v357
    %v359 = vrot.slane %v345, %v358
    %v360 = vcombine.high %v352, %v352
    %v361 = vcombine.high %v359, %v359
    %v363 = vunpack.c.l.s4 1966171168
    %v364 = vunpack.c.0.s8 %v363
    %v365 = vlaneseq
    %v366 = vshrl.u32 %v365, 7
    %v367 = vsub.s32 %v364, %v366
    %v368 = vrot.slane %v352, %v367
    %v370 = vunpack.c.l.s4 1966171168
    %v371 = vunpack.c.0.s8 %v370
    %v372 = vlaneseq
    %v373 = vshrl.u32 %v372, 7
    %v374 = vsub.s32 %v371, %v373
    %v375 = vrot.slane %v359, %v374
    %v377 = vunpack.c.l.s4 1966171168
    %v378 = vunpack.c.0.s8 %v377
    %v379 = vlaneseq
    %v380 = vshrl.u32 %v379, 7
    %v381 = vsub.s32 %v378, %v380
    %v382 = vrot.slane %v360, %v381
    %v384 = vunpack.c.l.s4 1966171168
    %v385 = vunpack.c.0.s8 %v384
    %v386 = vlaneseq
    %v387 = vshrl.u32 %v386, 7
    %v388 = vsub.s32 %v385, %v387
    %v389 = vrot.slane %v361, %v388
    %v390 = vcombine.high %v368, %v368
    %v391 = vcombine.high %v375, %v375
    %v392 = vcombine.high %v382, %v382
    %v393 = vcombine.high %v389, %v389
    %v403 = vcombine.high %v343, %v343
    %v405 = vunpack.c.l.s4 1966171168
    %v406 = vunpack.c.0.s8 %v405
    %v407 = vlaneseq
    %v408 = vshrl.u32 %v407, 7
    %v409 = vsub.s32 %v406, %v408
    %v410 = vrot.slane %v343, %v409
    %v412 = vunpack.c.l.s4 1966171168
    %v413 = vunpack.c.0.s8 %v412
    %v414 = vlaneseq
    %v415 = vshrl.u32 %v414, 7
    %v416 = vsub.s32 %v413, %v415
    %v417 = vrot.slane %v403, %v416
    %v418 = vcombine.high %v410, %v410
    %v419 = vcombine.high %v417, %v417
    %v421 = vunpack.c.l.s4 1966171168
    %v422 = vunpack.c.0.s8 %v421
    %v423 = vlaneseq
    %v424 = vshrl.u32 %v423, 7
    %v425 = vsub.s32 %v422, %v424
    %v426 = vrot.slane %v410, %v425
    %v428 = vunpack.c.l.s4 1966171168
    %v429 = vunpack.c.0.s8 %v428
    %v430 = vlaneseq
    %v431 = vshrl.u32 %v430, 7
    %v432 = vsub.s32 %v429, %v431
    %v433 = vrot.slane %v417, %v432
    %v435 = vunpack.c.l.s4 1966171168
    %v436 = vunpack.c.0.s8 %v435
    %v437 = vlaneseq
    %v438 = vshrl.u32 %v437, 7
    %v439 = vsub.s32 %v436, %v438
    %v440 = vrot.slane %v418, %v439
    %v442 = vunpack.c.l.s4 1966171168
    %v443 = vunpack.c.0.s8 %v442
    %v444 = vlaneseq
    %v445 = vshrl.u32 %v444, 7
    %v446 = vsub.s32 %v443, %v445
    %v447 = vrot.slane %v419, %v446
    %v448 = vcombine.high %v426, %v426
    %v449 = vcombine.high %v433, %v433
    %v450 = vcombine.high %v440, %v440
    %v451 = vcombine.high %v447, %v447
    %v452 = vlaneseq
    %v453 = vshrl.u32 %v452, 7
    %v454 = vsub.s32 0, %v453
    %v455 = vrot.slane %v426, %v454
    %v456 = vlaneseq
    %v457 = vshrl.u32 %v456, 7
    %v458 = vsub.s32 0, %v457
    %v459 = vrot.slane %v440, %v458
    %v460 = vlaneseq
    %v461 = vshrl.u32 %v460, 7
    %v462 = vsub.s32 0, %v461
    %v463 = vrot.slane %v448, %v462
    %v464 = vlaneseq
    %v465 = vshrl.u32 %v464, 7
    %v466 = vsub.s32 0, %v465
    %v467 = vrot.slane %v450, %v466
    %v468 = vlaneseq
    %v469 = vshrl.u32 %v468, 7
    %v470 = vsub.s32 0, %v469
    %v471 = vrot.slane %v433, %v470
    %v472 = vlaneseq
    %v473 = vshrl.u32 %v472, 7
    %v474 = vsub.s32 0, %v473
    %v475 = vrot.slane %v447, %v474
    %v476 = vlaneseq
    %v477 = vshrl.u32 %v476, 7
    %v478 = vsub.s32 0, %v477
    %v479 = vrot.slane %v449, %v478
    %v480 = vlaneseq
    %v481 = vshrl.u32 %v480, 7
    %v482 = vsub.s32 0, %v481
    %v483 = vrot.slane %v451, %v482
    %vm492 = vcmask 1040384
    %v493 = vsel %vm492, %v368, %v455
    %v494 = vsel %vm492, %v382, %v459
    %v495 = vsel %vm492, %v390, %v463
    %v496 = vsel %vm492, %v392, %v467
    %v497 = vsel %vm492, %v375, %v471
    %v498 = vsel %vm492, %v389, %v475
    %v499 = vsel %vm492, %v391, %v479
    %v500 = vsel %vm492, %v393, %v483
    %vm501 = vcmask 123904
    %502 = vst.msk [vmem:[#allocation8] sm:$0x3] %vm501, %v493
    %503 = vst.msk [vmem:[#allocation8 + $0x2] sm:$0x3] %vm501, %v494
    %504 = vst.msk [vmem:[#allocation8 + $0x4] sm:$0x3] %vm501, %v495
    %505 = vst.msk [vmem:[#allocation8 + $0x6] sm:$0x3] %vm501, %v496
    %506 = vst.msk [vmem:[#allocation8 + $0x8] sm:$0x3] %vm501, %v497
    %507 = vst.msk [vmem:[#allocation8 + $0xa] sm:$0x3] %vm501, %v498
    %508 = vst.msk [vmem:[#allocation8 + $0xc] sm:$0x3] %vm501, %v499
    %509 = vst.msk [vmem:[#allocation8 + $0xe] sm:$0x3] %vm501, %v500
    // Predicated region
    $region26: #{tpu_custom_call.1} parent=1 // pred_check
      _
    $region27: #{tpu_custom_call.1} parent=1 // pred_check_branch
      %511 = sbr.rel (0) target = $region29
    $region28: #{tpu_custom_call.1} parent=1 // pred_region
      %s513 = ssub.s32 256, 256
      %514 = vsyncadd [#allocation4], %s513
      %s515 = sshll.u32 [#allocation8], 4
      %s516 = int_to_ptr.vmem [resolvable:$true] %s515
      %521 = dma.vmem_to_hbm [thread:$0]  %s516, 256, %s3, [#allocation4], 32, 32, 2
    $region29: #{tpu_custom_call.1} parent=1 // pred_fallthru
      _
    // Predicated region
    $region30: #{tpu_custom_call.1} parent=1 // pred_check
      _
    $region31: #{tpu_custom_call.1} parent=1 // pred_check_branch
      %523 = sbr.rel (0) target = $region33
    $region32: #{tpu_custom_call.1} parent=1 // pred_region
      %524 = dma.done [#allocation4], 256
    $region33: #{tpu_custom_call.1} parent=1 // pred_fallthru
      _
    %525 = vsyncpa [#allocation3], 1
    %526 = vsyncpa [#allocation6], 1
    %527 = vsyncpa [#allocation4], 1

// kernel: tpu_custom_call.1
$region0: #{tpu_custom_call.1}
  #allocation0 [shape = 'u32[]', space=smem, size = 0x4, offset = 0x4, fixed_abs, tag = 'smem constant byte address 0x4 - core index']
  #allocation1 [shape = 'u32[144,128]{1,0:T(1,128)}', space=vmem, size = 0x12000, scoped, tag = 'internal scratch']
  %s0 = inlined_call_operand.hbm [shape: f32[2,8,32], index: 0, kind: input, shape index: {}]
  %s1 = inlined_call_operand.hbm [shape: f32[2,16,32], index: 1, kind: input, shape index: {}]
  %s2 = inlined_call_operand.hbm [shape: f32[32,32], index: 2, kind: input, shape index: {}]
  %s3 = inlined_call_operand.hbm [shape: f32[8,2,16], index: 3, kind: output, shape index: {}]
  %s4 = sld [smem:[#allocation0]]
  $region34: #{tpu_custom_call.1} parent=0
    _
  %s6 = ssub.s32 1, %s4
  %s7 = scalar_select 0, %s6, %s4
  $region1: #{tpu_custom_call.1} parent=0
    #allocation2 [shape = 'u8[8192]{0}', space=vmem, size = 0x2000, scoped, tag = 'input window, operand 0, single buffered']
    #allocation3 [shape = 's32[1]{0}', space=sflag, size = 0x4, scoped, tag = 'scoped memory for tpu_custom_call.1']
    #allocation4 [shape = 's32[1]{0}', space=sflag, size = 0x4, scoped, tag = 'scoped memory for tpu_custom_call.1']
    #allocation5 [shape = 'u8[16384]{0}', space=vmem, size = 0x4000, scoped, tag = 'input window, operand 1, single buffered']
    #allocation6 [shape = 's32[1]{0}', space=sflag, size = 0x4, scoped, tag = 'scoped memory for tpu_custom_call.1']
    #allocation7 [shape = 'u8[16384]{0}', space=vmem, size = 0x4000, scoped, tag = 'input window, operand 2, single buffered']
    #allocation8 [shape = 'u8[8192]{0}', space=vmem, size = 0x2000, scoped, tag = 'output window, operand 0, single buffered']
    %8 = vsyncpa [#allocation3], 0
    %9 = vsyncpa [#allocation6], 0
    %10 = vsyncpa [#allocation4], 0
    // Predicated region
    $region2: #{tpu_custom_call.1} parent=1 // pred_check
      _
    $region3: #{tpu_custom_call.1} parent=1 // pred_check_branch
      %12 = sbr.rel (0) target = $region5
    $region4: #{tpu_custom_call.1} parent=1 // pred_region
      %s14 = ssub.s32 256, 256
      %15 = vsyncadd [#allocation3], %s14
      %s16 = sshll.u32 [#allocation2], 4
      %s17 = int_to_ptr.vmem [resolvable:$true] %s16
      %22 = dma.hbm_to_vmem [thread:$0]  %s0, 256, %s17, [#allocation3], 128, 128, 8
    $region5: #{tpu_custom_call.1} parent=1 // pred_fallthru
      _
    // Predicated region
    $region6: #{tpu_custom_call.1} parent=1 // pred_check
      _
    $region7: #{tpu_custom_call.1} parent=1 // pred_check_branch
      %24 = sbr.rel (0) target = $region9
    $region8: #{tpu_custom_call.1} parent=1 // pred_region
      %s26 = ssub.s32 512, 512
      %27 = vsyncadd [#allocation6], %s26
      %s28 = sshll.u32 [#allocation5], 4
      %s29 = int_to_ptr.vmem [resolvable:$true] %s28
      %34 = dma.hbm_to_vmem [thread:$0]  %s1, 512, %s29, [#allocation6], 128, 128, 8
    $region9: #{tpu_custom_call.1} parent=1 // pred_fallthru
      _
    // Predicated region
    $region10: #{tpu_custom_call.1} parent=1 // pred_check
      _
    $region11: #{tpu_custom_call.1} parent=1 // pred_check_branch
      %36 = sbr.rel (0) target = $region13
    $region12: #{tpu_custom_call.1} parent=1 // pred_region
      %s38 = ssub.s32 512, 512
      %39 = vsyncadd [#allocation6], %s38
      %s40 = sshll.u32 [#allocation7], 4
      %s41 = int_to_ptr.vmem [resolvable:$true] %s40
      %46 = dma.hbm_to_vmem [thread:$0]  %s2, 512, %s41, [#allocation6], 128, 128, 8
    $region13: #{tpu_custom_call.1} parent=1 // pred_fallthru
      _
    // Predicated region
    $region14: #{tpu_custom_call.1} parent=1 // pred_check
      _
    $region15: #{tpu_custom_call.1} parent=1 // pred_check_branch
      %48 = sbr.rel (0) target = $region17
    $region16: #{tpu_custom_call.1} parent=1 // pred_region
      %49 = dma.done [#allocation3], 256
    $region17: #{tpu_custom_call.1} parent=1 // pred_fallthru
      _
    // Predicated region
    $region18: #{tpu_custom_call.1} parent=1 // pred_check
      _
    $region19: #{tpu_custom_call.1} parent=1 // pred_check_branch
      %51 = sbr.rel (0) target = $region21
    $region20: #{tpu_custom_call.1} parent=1 // pred_region
      %52 = dma.done [#allocation6], 512
    $region21: #{tpu_custom_call.1} parent=1 // pred_fallthru
      _
    // Predicated region
    $region22: #{tpu_custom_call.1} parent=1 // pred_check
      _
    $region23: #{tpu_custom_call.1} parent=1 // pred_check_branch
      %54 = sbr.rel (0) target = $region25
    $region24: #{tpu_custom_call.1} parent=1 // pred_region
      %55 = dma.done [#allocation6], 512
    $region25: #{tpu_custom_call.1} parent=1 // pred_fallthru
      _
    %v56 = vld [vmem:[#allocation7] sm:$0xff]
    %v57 = vld [vmem:[#allocation7 + $0x8] sm:$0xff]
    %v58 = vld [vmem:[#allocation7 + $0x10] sm:$0xff]
    %v59 = vld [vmem:[#allocation7 + $0x18] sm:$0xff]
    %v60 = vld [vmem:[#allocation2] sm:$0xff]
    %v61 = vld [vmem:[#allocation2 + $0x8] sm:$0xff]
    %vm62 = vcmask 261120
    %v64 = vsel %vm62, %v60, 0
    %v67 = vsel %vm62, %v61, 0
    %v70 = vsel %vm62, %v56, 0
    %v73 = vsel %vm62, %v57, 0
    %v76 = vsel %vm62, %v58, 0
    %v79 = vsel %vm62, %v59, 0
    %81 = vmatprep.subr.mxu0 0.0
    %82 = vmatpush1.xpose.msra.mxu0 %v70
    %83 = vmatprep.subr.mxu0 0.0
    %84 = vmatpush1.xpose.msra.mxu0 %v73
    %85 = vmatprep.subr.mxu0 0.0
    %86 = vmatpush1.xpose.msra.mxu0 %v76
    %87 = vmatprep.subr.mxu0 0.0
    %88 = vmatpush1.xpose.msra.mxu0 %v79
    %89 = vmatprep.subr.mxu0 0.0
    %90 = vmatpush1.xpose.msra.mxu0 0.0
    %91 = vmatprep.subr.mxu0 0.0
    %92 = vmatpush1.xpose.msra.mxu0 0.0
    %93 = vmatprep.subr.mxu0 0.0
    %94 = vmatpush1.xpose.msra.mxu0 0.0
    %95 = vmatprep.subr.mxu0 0.0
    %96 = vmatpush1.xpose.msra.mxu0 0.0
    %97 = vmatprep.subr.mxu0 0.0
    %98 = vmatpush1.xpose.msra.mxu0 0.0
    %99 = vmatprep.subr.mxu0 0.0
    %100 = vmatpush1.xpose.msra.mxu0 0.0
    %101 = vmatprep.subr.mxu0 0.0
    %102 = vmatpush1.xpose.msra.mxu0 0.0
    %103 = vmatprep.subr.mxu0 0.0
    %104 = vmatpush1.xpose.msra.mxu0 0.0
    %105 = vmatprep.subr.mxu0 0.0
    %106 = vmatpush1.xpose.msra.mxu0 0.0
    %107 = vmatprep.subr.mxu0 0.0
    %108 = vmatpush1.xpose.msra.mxu0 0.0
    %109 = vmatprep.subr.mxu0 0.0
    %110 = vmatpush1.xpose.msra.mxu0 0.0
    %111 = vmatprep.subr.mxu0 0.0
    %112 = vmatpush1.xpose.msra.mxu0 0.0
    %113 = vmatprep.subr.mxu0 0.0
    %114 = vmatpush1.xpose.msra.mxu0 0.0
    %115 = vmatprep.subr.mxu0 0.0
    %116 = vmatpush1.xpose.msra.mxu0 0.0
    %117 = vmatprep.subr.mxu0 0.0
    %118 = vmatpush1.xpose.msra.mxu0 0.0
    %119 = vmatprep.subr.mxu0 0.0
    %120 = vmatpush1.xpose.msra.mxu0 0.0
    %121 = vmatprep.subr.mxu0 0.0
    %122 = vmatpush1.xpose.msra.mxu0 0.0
    %123 = vmatprep.subr.mxu0 0.0
    %124 = vmatpush1.xpose.msra.mxu0 0.0
    %125 = vmatprep.subr.mxu0 0.0
    %126 = vmatpush1.xpose.msra.mxu0 0.0
    %127 = vmatprep.subr.mxu0 0.0
    %128 = vmatpush1.xpose.msra.mxu0 0.0
    %129 = vmatprep.subr.mxu0 0.0
    %130 = vmatpush1.xpose.msra.mxu0 0.0
    %131 = vmatprep.subr.mxu0 0.0
    %132 = vmatpush1.xpose.msra.mxu0 0.0
    %133 = vmatprep.subr.mxu0 0.0
    %134 = vmatpush1.xpose.msra.mxu0 0.0
    %135 = vmatprep.subr.mxu0 0.0
    %136 = vmatpush1.xpose.msra.mxu0 0.0
    %137 = vmatprep.subr.mxu0 0.0
    %138 = vmatpush1.xpose.msra.mxu0 0.0
    %139 = vmatprep.subr.mxu0 0.0
    %140 = vmatpush1.xpose.msra.mxu0 0.0
    %141 = vmatprep.subr.mxu0 0.0
    %142 = vmatpush1.xpose.msra.mxu0 0.0
    %143 = vmatprep.subr.mxu0 0.0
    %144 = vmatpush1.xpose.msra.mxu0 0.0
    %145 = vmatprep.mubr.f32.mxu0 0.0
    %146 = vmatmul.mubr.f32.gmra.mrb[0].mxu0 %v64
    %v147 = vpop.f32.mrb[0].mxu0
    %v148 = vadd.f32 0.0, %v147
    %v149 = vpop.f32.mrb[0].mxu0
    %150 = vmatprep.mubr.f32.mxu0 0.0
    %151 = vmatmul.mubr.f32.gmra.mrb[0].mxu0 %v67
    %v152 = vpop.f32.mrb[0].mxu0
    %v153 = vadd.f32 0.0, %v152
    %v154 = vpop.f32.mrb[0].mxu0
    %155 = vdwg.mxu0
    %v156 = vld [vmem:[#allocation5] sm:$0xff]
    %v157 = vld [vmem:[#allocation5 + $0x8] sm:$0xff]
    %v159 = vsel %vm62, %v148, 0
    %v162 = vsel %vm62, %v156, 0
    %v165 = vsel %vm62, %v157, 0
    %167 = vmatprep.subr.mxu0 0.0
    %168 = vmatpush1.xpose.msra.mxu0 %v162
    %169 = vmatprep.subr.mxu0 0.0
    %170 = vmatpush1.xpose.msra.mxu0 %v165
    %171 = vmatprep.subr.mxu0 0.0
    %172 = vmatpush1.xpose.msra.mxu0 0.0
    %173 = vmatprep.subr.mxu0 0.0
    %174 = vmatpush1.xpose.msra.mxu0 0.0
    %175 = vmatprep.subr.mxu0 0.0
    %176 = vmatpush1.xpose.msra.mxu0 0.0
    %177 = vmatprep.subr.mxu0 0.0
    %178 = vmatpush1.xpose.msra.mxu0 0.0
    %179 = vmatprep.subr.mxu0 0.0
    %180 = vmatpush1.xpose.msra.mxu0 0.0
    %181 = vmatprep.subr.mxu0 0.0
    %182 = vmatpush1.xpose.msra.mxu0 0.0
    %183 = vmatprep.subr.mxu0 0.0
    %184 = vmatpush1.xpose.msra.mxu0 0.0
    %185 = vmatprep.subr.mxu0 0.0
    %186 = vmatpush1.xpose.msra.mxu0 0.0
    %187 = vmatprep.subr.mxu0 0.0
    %188 = vmatpush1.xpose.msra.mxu0 0.0
    %189 = vmatprep.subr.mxu0 0.0
    %190 = vmatpush1.xpose.msra.mxu0 0.0
    %191 = vmatprep.subr.mxu0 0.0
    %192 = vmatpush1.xpose.msra.mxu0 0.0
    %193 = vmatprep.subr.mxu0 0.0
    %194 = vmatpush1.xpose.msra.mxu0 0.0
    %195 = vmatprep.subr.mxu0 0.0
    %196 = vmatpush1.xpose.msra.mxu0 0.0
    %197 = vmatprep.subr.mxu0 0.0
    %198 = vmatpush1.xpose.msra.mxu0 0.0
    %199 = vmatprep.subr.mxu0 0.0
    %200 = vmatpush1.xpose.msra.mxu0 0.0
    %201 = vmatprep.subr.mxu0 0.0
    %202 = vmatpush1.xpose.msra.mxu0 0.0
    %203 = vmatprep.subr.mxu0 0.0
    %204 = vmatpush1.xpose.msra.mxu0 0.0
    %205 = vmatprep.subr.mxu0 0.0
    %206 = vmatpush1.xpose.msra.mxu0 0.0
    %207 = vmatprep.subr.mxu0 0.0
    %208 = vmatpush1.xpose.msra.mxu0 0.0
    %209 = vmatprep.subr.mxu0 0.0
    %210 = vmatpush1.xpose.msra.mxu0 0.0
    %211 = vmatprep.subr.mxu0 0.0
    %212 = vmatpush1.xpose.msra.mxu0 0.0
    %213 = vmatprep.subr.mxu0 0.0
    %214 = vmatpush1.xpose.msra.mxu0 0.0
    %215 = vmatprep.subr.mxu0 0.0
    %216 = vmatpush1.xpose.msra.mxu0 0.0
    %217 = vmatprep.subr.mxu0 0.0
    %218 = vmatpush1.xpose.msra.mxu0 0.0
    %219 = vmatprep.subr.mxu0 0.0
    %220 = vmatpush1.xpose.msra.mxu0 0.0
    %221 = vmatprep.subr.mxu0 0.0
    %222 = vmatpush1.xpose.msra.mxu0 0.0
    %223 = vmatprep.subr.mxu0 0.0
    %224 = vmatpush1.xpose.msra.mxu0 0.0
    %225 = vmatprep.subr.mxu0 0.0
    %226 = vmatpush1.xpose.msra.mxu0 0.0
    %227 = vmatprep.subr.mxu0 0.0
    %228 = vmatpush1.xpose.msra.mxu0 0.0
    %229 = vmatprep.subr.mxu0 0.0
    %230 = vmatpush1.xpose.msra.mxu0 0.0
    %231 = vmatprep.mubr.f32.mxu0 0.0
    %232 = vmatmul.mubr.f32.gmra.mrb[0].mxu0 %v159
    %v233 = vpop.f32.mrb[0].mxu0
    %v234 = vadd.f32 0.0, %v233
    %v235 = vpop.f32.mrb[0].mxu0
    %236 = vdwg.mxu0
    %vm237 = vcmask 130048
    %v238 = vsel %vm237, %v234, -inf
    %239 = vmax.xlane.f32.xlu0 %v238
    %v240 = vpop.xlane.xlu0 %239
    %v241 = vsub.f32 %v234, %v240
    %v242 = vmul.f32 %v241, 1.442695
    %v243 = vpow.pop %v242
    %v244 = vsel %vm237, %v243, 0.0
    %245 = vadd.xlane.f32.xlu0 %v244
    %v246 = vpop.xlane.xlu0 %245
    %v247 = vlog2.pop %v246
    %v248 = vmul.f32 %v247, 0.6931472
    %v249 = vsub.f32 %v241, %v248
    %s250 = scalar_lea.vmem [#allocation5], 16
    %v251 = vld [vmem:[%s250] sm:$0xff]
    %v252 = vld [vmem:[%s250 + $0x8] sm:$0xff]
    %v254 = vsel %vm62, %v153, 0
    %v257 = vsel %vm62, %v251, 0
    %v260 = vsel %vm62, %v252, 0
    %262 = vmatprep.subr.mxu0 0.0
    %263 = vmatpush1.xpose.msra.mxu0 %v257
    %264 = vmatprep.subr.mxu0 0.0
    %265 = vmatpush1.xpose.msra.mxu0 %v260
    %266 = vmatprep.subr.mxu0 0.0
    %267 = vmatpush1.xpose.msra.mxu0 0.0
    %268 = vmatprep.subr.mxu0 0.0
    %269 = vmatpush1.xpose.msra.mxu0 0.0
    %270 = vmatprep.subr.mxu0 0.0
    %271 = vmatpush1.xpose.msra.mxu0 0.0
    %272 = vmatprep.subr.mxu0 0.0
    %273 = vmatpush1.xpose.msra.mxu0 0.0
    %274 = vmatprep.subr.mxu0 0.0
    %275 = vmatpush1.xpose.msra.mxu0 0.0
    %276 = vmatprep.subr.mxu0 0.0
    %277 = vmatpush1.xpose.msra.mxu0 0.0
    %278 = vmatprep.subr.mxu0 0.0
    %279 = vmatpush1.xpose.msra.mxu0 0.0
    %280 = vmatprep.subr.mxu0 0.0
    %281 = vmatpush1.xpose.msra.mxu0 0.0
    %282 = vmatprep.subr.mxu0 0.0
    %283 = vmatpush1.xpose.msra.mxu0 0.0
    %284 = vmatprep.subr.mxu0 0.0
    %285 = vmatpush1.xpose.msra.mxu0 0.0
    %286 = vmatprep.subr.mxu0 0.0
    %287 = vmatpush1.xpose.msra.mxu0 0.0
    %288 = vmatprep.subr.mxu0 0.0
    %289 = vmatpush1.xpose.msra.mxu0 0.0
    %290 = vmatprep.subr.mxu0 0.0
    %291 = vmatpush1.xpose.msra.mxu0 0.0
    %292 = vmatprep.subr.mxu0 0.0
    %293 = vmatpush1.xpose.msra.mxu0 0.0
    %294 = vmatprep.subr.mxu0 0.0
    %295 = vmatpush1.xpose.msra.mxu0 0.0
    %296 = vmatprep.subr.mxu0 0.0
    %297 = vmatpush1.xpose.msra.mxu0 0.0
    %298 = vmatprep.subr.mxu0 0.0
    %299 = vmatpush1.xpose.msra.mxu0 0.0
    %300 = vmatprep.subr.mxu0 0.0
    %301 = vmatpush1.xpose.msra.mxu0 0.0
    %302 = vmatprep.subr.mxu0 0.0
    %303 = vmatpush1.xpose.msra.mxu0 0.0
    %304 = vmatprep.subr.mxu0 0.0
    %305 = vmatpush1.xpose.msra.mxu0 0.0
    %306 = vmatprep.subr.mxu0 0.0
    %307 = vmatpush1.xpose.msra.mxu0 0.0
    %308 = vmatprep.subr.mxu0 0.0
    %309 = vmatpush1.xpose.msra.mxu0 0.0
    %310 = vmatprep.subr.mxu0 0.0
    %311 = vmatpush1.xpose.msra.mxu0 0.0
    %312 = vmatprep.subr.mxu0 0.0
    %313 = vmatpush1.xpose.msra.mxu0 0.0
    %314 = vmatprep.subr.mxu0 0.0
    %315 = vmatpush1.xpose.msra.mxu0 0.0
    %316 = vmatprep.subr.mxu0 0.0
    %317 = vmatpush1.xpose.msra.mxu0 0.0
    %318 = vmatprep.subr.mxu0 0.0
    %319 = vmatpush1.xpose.msra.mxu0 0.0
    %320 = vmatprep.subr.mxu0 0.0
    %321 = vmatpush1.xpose.msra.mxu0 0.0
    %322 = vmatprep.subr.mxu0 0.0
    %323 = vmatpush1.xpose.msra.mxu0 0.0
    %324 = vmatprep.subr.mxu0 0.0
    %325 = vmatpush1.xpose.msra.mxu0 0.0
    %326 = vmatprep.mubr.f32.mxu0 0.0
    %327 = vmatmul.mubr.f32.gmra.mrb[0].mxu0 %v254
    %v328 = vpop.f32.mrb[0].mxu0
    %v329 = vadd.f32 0.0, %v328
    %v330 = vpop.f32.mrb[0].mxu0
    %331 = vdwg.mxu0
    %v332 = vsel %vm237, %v329, -inf
    %333 = vmax.xlane.f32.xlu0 %v332
    %v334 = vpop.xlane.xlu0 %333
    %v335 = vsub.f32 %v329, %v334
    %v336 = vmul.f32 %v335, 1.442695
    %v337 = vpow.pop %v336
    %v338 = vsel %vm237, %v337, 0.0
    %339 = vadd.xlane.f32.xlu0 %v338
    %v340 = vpop.xlane.xlu0 %339
    %v341 = vlog2.pop %v340
    %v342 = vmul.f32 %v341, 0.6931472
    %v343 = vsub.f32 %v335, %v342
    %v345 = vcombine.high %v249, %v249
    %v347 = vunpack.c.l.s4 1966171168
    %v348 = vunpack.c.0.s8 %v347
    %v349 = vlaneseq
    %v350 = vshrl.u32 %v349, 7
    %v351 = vsub.s32 %v348, %v350
    %v352 = vrot.slane %v249, %v351
    %v354 = vunpack.c.l.s4 1966171168
    %v355 = vunpack.c.0.s8 %v354
    %v356 = vlaneseq
    %v357 = vshrl.u32 %v356, 7
    %v358 = vsub.s32 %v355, %v357
    %v359 = vrot.slane %v345, %v358
    %v360 = vcombine.high %v352, %v352
    %v361 = vcombine.high %v359, %v359
    %v363 = vunpack.c.l.s4 1966171168
    %v364 = vunpack.c.0.s8 %v363
    %v365 = vlaneseq
    %v366 = vshrl.u32 %v365, 7
    %v367 = vsub.s32 %v364, %v366
    %v368 = vrot.slane %v352, %v367
    %v370 = vunpack.c.l.s4 1966171168
    %v371 = vunpack.c.0.s8 %v370
    %v372 = vlaneseq
    %v373 = vshrl.u32 %v372, 7
    %v374 = vsub.s32 %v371, %v373
    %v375 = vrot.slane %v359, %v374
    %v377 = vunpack.c.l.s4 1966171168
    %v378 = vunpack.c.0.s8 %v377
    %v379 = vlaneseq
    %v380 = vshrl.u32 %v379, 7
    %v381 = vsub.s32 %v378, %v380
    %v382 = vrot.slane %v360, %v381
    %v384 = vunpack.c.l.s4 1966171168
    %v385 = vunpack.c.0.s8 %v384
    %v386 = vlaneseq
    %v387 = vshrl.u32 %v386, 7
    %v388 = vsub.s32 %v385, %v387
    %v389 = vrot.slane %v361, %v388
    %v390 = vcombine.high %v368, %v368
    %v391 = vcombine.high %v375, %v375
    %v392 = vcombine.high %v382, %v382
    %v393 = vcombine.high %v389, %v389
    %v403 = vcombine.high %v343, %v343
    %v405 = vunpack.c.l.s4 1966171168
    %v406 = vunpack.c.0.s8 %v405
    %v407 = vlaneseq
    %v408 = vshrl.u32 %v407, 7
    %v409 = vsub.s32 %v406, %v408
    %v410 = vrot.slane %v343, %v409
    %v412 = vunpack.c.l.s4 1966171168
    %v413 = vunpack.c.0.s8 %v412
    %v414 = vlaneseq
    %v415 = vshrl.u32 %v414, 7
    %v416 = vsub.s32 %v413, %v415
    %v417 = vrot.slane %v403, %v416
    %v418 = vcombine.high %v410, %v410
    %v419 = vcombine.high %v417, %v417
    %v421 = vunpack.c.l.s4 1966171168
    %v422 = vunpack.c.0.s8 %v421
    %v423 = vlaneseq
    %v424 = vshrl.u32 %v423, 7
    %v425 = vsub.s32 %v422, %v424
    %v426 = vrot.slane %v410, %v425
    %v428 = vunpack.c.l.s4 1966171168
    %v429 = vunpack.c.0.s8 %v428
    %v430 = vlaneseq
    %v431 = vshrl.u32 %v430, 7
    %v432 = vsub.s32 %v429, %v431
    %v433 = vrot.slane %v417, %v432
    %v435 = vunpack.c.l.s4 1966171168
    %v436 = vunpack.c.0.s8 %v435
    %v437 = vlaneseq
    %v438 = vshrl.u32 %v437, 7
    %v439 = vsub.s32 %v436, %v438
    %v440 = vrot.slane %v418, %v439
    %v442 = vunpack.c.l.s4 1966171168
    %v443 = vunpack.c.0.s8 %v442
    %v444 = vlaneseq
    %v445 = vshrl.u32 %v444, 7
    %v446 = vsub.s32 %v443, %v445
    %v447 = vrot.slane %v419, %v446
    %v448 = vcombine.high %v426, %v426
    %v449 = vcombine.high %v433, %v433
    %v450 = vcombine.high %v440, %v440
    %v451 = vcombine.high %v447, %v447
    %v452 = vlaneseq
    %v453 = vshrl.u32 %v452, 7
    %v454 = vsub.s32 0, %v453
    %v455 = vrot.slane %v426, %v454
    %v456 = vlaneseq
    %v457 = vshrl.u32 %v456, 7
    %v458 = vsub.s32 0, %v457
    %v459 = vrot.slane %v440, %v458
    %v460 = vlaneseq
    %v461 = vshrl.u32 %v460, 7
    %v462 = vsub.s32 0, %v461
    %v463 = vrot.slane %v448, %v462
    %v464 = vlaneseq
    %v465 = vshrl.u32 %v464, 7
    %v466 = vsub.s32 0, %v465
    %v467 = vrot.slane %v450, %v466
    %v468 = vlaneseq
    %v469 = vshrl.u32 %v468, 7
    %v470 = vsub.s32 0, %v469
    %v471 = vrot.slane %v433, %v470
    %v472 = vlaneseq
    %v473 = vshrl.u32 %v472, 7
    %v474 = vsub.s32 0, %v473
    %v475 = vrot.slane %v447, %v474
    %v476 = vlaneseq
    %v477 = vshrl.u32 %v476, 7
    %v478 = vsub.s32 0, %v477
    %v479 = vrot.slane %v449, %v478
    %v480 = vlaneseq
    %v481 = vshrl.u32 %v480, 7
    %v482 = vsub.s32 0, %v481
    %v483 = vrot.slane %v451, %v482
    %vm492 = vcmask 1040384
    %v493 = vsel %vm492, %v368, %v455
    %v494 = vsel %vm492, %v382, %v459
    %v495 = vsel %vm492, %v390, %v463
    %v496 = vsel %vm492, %v392, %v467
    %v497 = vsel %vm492, %v375, %v471
    %v498 = vsel %vm492, %v389, %v475
    %v499 = vsel %vm492, %v391, %v479
    %v500 = vsel %vm492, %v393, %v483
    %vm501 = vcmask 123904
    %502 = vst.msk [vmem:[#allocation8] sm:$0x3] %vm501, %v493
    %503 = vst.msk [vmem:[#allocation8 + $0x2] sm:$0x3] %vm501, %v494
    %504 = vst.msk [vmem:[#allocation8 + $0x4] sm:$0x3] %vm501, %v495
    %505 = vst.msk [vmem:[#allocation8 + $0x6] sm:$0x3] %vm501, %v496
    %506 = vst.msk [vmem:[#allocation8 + $0x8] sm:$0x3] %vm501, %v497
    %507 = vst.msk [vmem:[#allocation8 + $0xa] sm:$0x3] %vm501, %v498
    %508 = vst.msk [vmem:[#allocation8 + $0xc] sm:$0x3] %vm501, %v499
    %509 = vst.msk [vmem:[#allocation8 + $0xe] sm:$0x3] %vm501, %v500
    // Predicated region
    $region26: #{tpu_custom_call.1} parent=1 // pred_check
      _
    $region27: #{tpu_custom_call.1} parent=1 // pred_check_branch
      %511 = sbr.rel (0) target = $region29
    $region28: #{tpu_custom_call.1} parent=1 // pred_region
      %s513 = ssub.s32 256, 256
      %514 = vsyncadd [#allocation4], %s513
      %s515 = sshll.u32 [#allocation8], 4
      %s516 = int_to_ptr.vmem [resolvable:$true] %s515
      %521 = dma.vmem_to_hbm [thread:$0]  %s516, 256, %s3, [#allocation4], 32, 32, 2
    $region29: #{tpu_custom_call.1} parent=1 // pred_fallthru
      _
    // Predicated region
    $region30: #{tpu_custom_call.1} parent=1 // pred_check
      _
    $region31: #{tpu_custom_call.1} parent=1 // pred_check_branch
      %523 = sbr.rel (0) target = $region33
    $region32: #{tpu_custom_call.1} parent=1 // pred_region
      %524 = dma.done [#allocation4], 256
    $region33: #{tpu_custom_call.1} parent=1 // pred_fallthru
      _
    %525 = vsyncpa [#allocation3], 1
    %526 = vsyncpa [#allocation6], 1
    %527 = vsyncpa [#allocation4], 1

</llo_original>
